<compile_context>
chip_gen: v6e
topology: v6e:2x2x1
jax: 0.10.0
libtpu: 0.0.40
codegen_flags: <defaults>
</compile_context>

<pallas_src>
import functools

import jax
import jax.numpy as jnp
from jax import lax
from jax.experimental import pallas as pl
from jax.experimental.pallas import tpu as pltpu


def _tmn_kernel(h_ref, mod_ref, gavg_ref, o_ref, *, eps: float, mode: str, hw: int):
    """One grid step == one (batch, channel-block) tile, channels-first.

    h_ref    : (1, CB, HW)   input features (input dtype)
    mod_ref  : (1, CB, K)    per-(batch,channel) columns
                 scale_shift: K=2, [gamma*(1+scale), beta*(1+scale)+shift]
                 add:         K=3, [add, gamma, beta]
    gavg_ref : (CB, CB)      group-average matrix (1/(cpg*HW) on same-group entries)
    o_ref    : (1, CB, HW)
    """
    x = h_ref[0].astype(jnp.float32)              # (CB, HW)
    mod = mod_ref[0].astype(jnp.float32)          # (CB, K)
    gavg = gavg_ref[...]                          # (CB, CB) f32

    # ---- GroupNorm stats (two-pass, f32) with add folded into the columns ----
    sum_c = jnp.sum(x, axis=1, keepdims=True)     # (CB, 1) lane reduce
    if mode == "add":
        a = mod[:, 0:1]
        sum_c = sum_c + jnp.float32(hw) * a       # sum(x + a) == sum(x) + HW*a
    mean = jnp.dot(gavg, sum_c,
                   preferred_element_type=jnp.float32)   # per-group mean, (CB, 1)
    if mode == "add":
        mean = mean - a                           # d = x - (mean - a) == (x + a) - mean
    d = x - mean
    sqsum_c = jnp.sum(d * d, axis=1, keepdims=True)
    var = jnp.dot(gavg, sqsum_c,
                  preferred_element_type=jnp.float32)    # per-group var, (CB, 1)
    inv = lax.rsqrt(var + jnp.float32(eps))

    # ---- folded affine + modulation: 2 VPU ops per element ----
    if mode == "scale_shift":
        coeff = inv * mod[:, 0:1]                 # inv * gamma*(1+scale)
        off = mod[:, 1:2]                         # beta*(1+scale) + shift
    else:
        coeff = inv * mod[:, 1:2]                 # inv * gamma
        off = mod[:, 2:3]                         # beta
    o_ref[0] = (d * coeff + off).astype(o_ref.dtype)


def _vmem_limit_bytes():
    """Generation-aware scoped-VMEM limit (v7x: 64 MiB/TC; v5e/v6e: 128 MiB)."""
    cap = 0
    try:
        cap = int(getattr(pltpu.get_tpu_info(), "vmem_capacity_bytes", 0))
    except Exception:
        cap = 0
    if cap <= 0:
        cap = 64 << 20                 # conservative: assume v7x-sized VMEM
    if cap <= (64 << 20):
        return 40 << 20                # v7x-class: leave headroom on 64 MiB
    return 96 << 20                    # v5e/v6e: raise well past 16/32 MiB defaults


def _choose_channel_block(C, num_groups, HW, itemsize, budget_bytes, prefer_split):
    """Largest group-aligned channel block whose *total* VMEM residency fits.

    Residency model per grid step: 2x double-buffered input block +
    2x double-buffered output block + ~2 full-block f32 temporaries
    (x and d are materialized since CB*HW >> the 64-vreg register file).
    """
    cpg = C // num_groups
    # sublane alignment for the second-to-last block dim (packed dtypes need more)
    min_align = 8 * max(1, 4 // max(1, itemsize))

    def residency(cb):
        elems = cb * HW
        return 4 * elems * itemsize + 2 * elems * 4

    cands = []
    for k in range(1, num_groups + 1):
        if num_groups % k:
            continue
        cb = k * cpg
        if cb != C and cb % min_align:
            continue
        cands.append(cb)

    fitting = [cb for cb in cands if residency(cb) <= budget_bytes]
    if not fitting:
        # TODO(synk): two-phase (stats, then apply) HW-tiled path for the case
        # where even a single group's (cpg, HW) slab exceeds VMEM.
        return min(cands)
    cb = max(fitting)
    if prefer_split and cb == C:
        smaller = [c for c in fitting if c < C]
        if smaller:                    # keep >= 2 grid steps for v7x's 2 TensorCores
            cb = max(smaller)
    return cb


def timestep_modulated_norm(h_nchw, t_emb, weight, bias, gamma, beta,
                            *, num_groups: int, eps: float = 1e-5,
                            mode: str = "scale_shift",
                            block_budget_bytes: int | None = None):
    """Pallas forward of TimestepModulatedNormalization.

    h_nchw : (B, C, H, W)  PyTorch NCHW conv features (any float dtype)
    t_emb  : (B, T)
    weight : (P, T)  nn.Linear weight (P = 2C for scale_shift, C for add)
    bias   : (P,)
    gamma  : (C,)    GroupNorm weight
    beta   : (C,)    GroupNorm bias
    """
    assert mode in ("scale_shift", "add")
    B, C, H, W = h_nchw.shape
    HW = H * W
    assert C % num_groups == 0
    cpg = C // num_groups

    # --- hoisted projection: one small (B,T)@(T,P) matmul, done by XLA ---
    s = t_emb.astype(jnp.float32)
    s = s * jax.nn.sigmoid(s)                                        # SiLU
    proj = s @ weight.astype(jnp.float32).T + bias.astype(jnp.float32)  # (B, P)

    gamma_f = gamma.astype(jnp.float32)
    beta_f = beta.astype(jnp.float32)

    # --- fold modulation + affine into a single per-(batch,channel) column stream ---
    if mode == "scale_shift":
        scale = proj[:, :C]                                          # torch.chunk order
        shift = proj[:, C:]
        gp = gamma_f[None, :] * (1.0 + scale)                        # (B, C)
        bp = beta_f[None, :] * (1.0 + scale) + shift                 # (B, C)
        mod = jnp.stack([gp, bp], axis=-1)                           # (B, C, 2)
    else:
        mod = jnp.stack([proj,
                         jnp.broadcast_to(gamma_f[None, :], (B, C)),
                         jnp.broadcast_to(beta_f[None, :], (B, C))],
                        axis=-1)                                     # (B, C, 3)
    K = mod.shape[-1]

    # --- NCHW-native, channels-first: only a free reshape, no transpose ---
    h_flat = h_nchw.reshape(B, C, HW)
    itemsize = h_flat.dtype.itemsize

    vmem_limit = _vmem_limit_bytes()
    budget = (block_budget_bytes if block_budget_bytes is not None
              else int(0.8 * vmem_limit))
    CB = _choose_channel_block(C, num_groups, HW, itemsize, budget,
                               prefer_split=(B == 1))
    n_ct = C // CB

    # --- single (CB, CB) group-average constant tile (identical for all blocks) ---
    gids = jnp.arange(CB, dtype=jnp.int32) // cpg
    gavg = ((gids[:, None] == gids[None, :]).astype(jnp.float32)
            / jnp.float32(cpg * HW))                                 # (CB, CB)

    kernel = functools.partial(_tmn_kernel, eps=eps, mode=mode, hw=HW)

    cost = pl.CostEstimate(
        flops=int(10 * B * C * HW),
        transcendentals=int(B * C),
        bytes_accessed=int(2 * B * C * HW * itemsize + mod.size * 4 + gavg.size * 4))

    out_flat = pl.pallas_call(
        kernel,
        out_shape=jax.ShapeDtypeStruct((B, C, HW), h_flat.dtype),
        grid_spec=pltpu.PrefetchScalarGridSpec(
            num_scalar_prefetch=0,
            grid=(B, n_ct),
            in_specs=[
                pl.BlockSpec((1, CB, HW), lambda b, g: (b, g, 0)),   # h
                pl.BlockSpec((1, CB, K), lambda b, g: (b, g, 0)),    # folded columns
                pl.BlockSpec((CB, CB), lambda b, g: (0, 0)),         # shared gavg tile
            ],
            out_specs=pl.BlockSpec((1, CB, HW), lambda b, g: (b, g, 0)),
        ),
        compiler_params=pltpu.CompilerParams(
            dimension_semantics=("parallel", "parallel"),
            vmem_limit_bytes=int(vmem_limit)),
        cost_estimate=cost,
    )(h_flat, mod, gavg)

    return out_flat.reshape(B, C, H, W)


# ---------------- pure-JAX reference (mirrors the PyTorch module) ----------------
def reference(h_nchw, t_emb, weight, bias, gamma, beta, *, num_groups, eps, mode):
    B, C, H, W = h_nchw.shape
    s = t_emb * jax.nn.sigmoid(t_emb)
    proj = s @ weight.T + bias                                       # (B, P)

    def group_norm(x):
        xg = x.reshape(B, num_groups, (C // num_groups) * H * W)
        mean = xg.mean(-1, keepdims=True)
        var = ((xg - mean) ** 2).mean(-1, keepdims=True)
        xn = ((xg - mean) / jnp.sqrt(var + eps)).reshape(B, C, H, W)
        return xn * gamma.reshape(1, C, 1, 1) + beta.reshape(1, C, 1, 1)

    if mode == "scale_shift":
        hn = group_norm(h_nchw)
        scale, shift = proj[:, :C], proj[:, C:]
        return hn * (1.0 + scale.reshape(B, C, 1, 1)) + shift.reshape(B, C, 1, 1)
    else:  # add
        return group_norm(h_nchw + proj.reshape(B, C, 1, 1))


if __name__ == "__main__":
    EPS = 1e-5

    # ---- case 1/2: small shape, both modes, full-C block ----
    B, C, H, W = 2, 8, 16, 16
    T = 32
    G = 2

    key = jax.random.PRNGKey(0)
    k_h, k_e, k_w1, k_b1, k_w2, k_b2, k_g, k_be = jax.random.split(key, 8)

    h = jax.random.normal(k_h, (B, C, H, W), dtype=jnp.float32)
    t_emb = jax.random.normal(k_e, (B, T), dtype=jnp.float32)

    bound = 1.0 / (T ** 0.5)
    w_ss = jax.random.uniform(k_w1, (2 * C, T), jnp.float32, -bound, bound)
    b_ss = jax.random.uniform(k_b1, (2 * C,), jnp.float32, -bound, bound)
    w_add = jax.random.uniform(k_w2, (C, T), jnp.float32, -bound, bound)
    b_add = jax.random.uniform(k_b2, (C,), jnp.float32, -bound, bound)
    gamma = 1.0 + 0.1 * jax.random.normal(k_g, (C,), jnp.float32)
    beta = 0.1 * jax.random.normal(k_be, (C,), jnp.float32)

    out_ss = timestep_modulated_norm(h, t_emb, w_ss, b_ss, gamma, beta,
                                     num_groups=G, eps=EPS, mode="scale_shift")
    out_ss = jax.block_until_ready(out_ss)
    ref_ss = reference(h, t_emb, w_ss, b_ss, gamma, beta,
                       num_groups=G, eps=EPS, mode="scale_shift")
    assert out_ss.shape == (B, C, H, W)
    assert jnp.allclose(out_ss, ref_ss, atol=1e-4, rtol=1e-4), "scale_shift mismatch"

    out_add = timestep_modulated_norm(h, t_emb, w_add, b_add, gamma, beta,
                                      num_groups=G, eps=EPS, mode="add")
    out_add = jax.block_until_ready(out_add)
    ref_add = reference(h, t_emb, w_add, b_add, gamma, beta,
                        num_groups=G, eps=EPS, mode="add")
    assert jnp.allclose(out_add, ref_add, atol=1e-4, rtol=1e-4), "add mismatch"

    # ---- case 3: force the channel-tiled path (CB < C) with a tiny block budget ----
    B2, C2, H2, W2, G2 = 2, 256, 8, 8, 4
    kk = jax.random.split(jax.random.PRNGKey(1), 6)
    h2 = jax.random.normal(kk[0], (B2, C2, H2, W2), dtype=jnp.float32)
    t2 = jax.random.normal(kk[1], (B2, T), dtype=jnp.float32)
    w2 = jax.random.uniform(kk[2], (2 * C2, T), jnp.float32, -bound, bound)
    bb2 = jax.random.uniform(kk[3], (2 * C2,), jnp.float32, -bound, bound)
    g2 = 1.0 + 0.1 * jax.random.normal(kk[4], (C2,), jnp.float32)
    be2 = 0.1 * jax.random.normal(kk[5], (C2,), jnp.float32)

    out_t = timestep_modulated_norm(h2, t2, w2, bb2, g2, be2,
                                    num_groups=G2, eps=EPS, mode="scale_shift",
                                    block_budget_bytes=150 * 1024)
    out_t = jax.block_until_ready(out_t)
    ref_t = reference(h2, t2, w2, bb2, g2, be2,
                      num_groups=G2, eps=EPS, mode="scale_shift")
    assert jnp.allclose(out_t, ref_t, atol=1e-4, rtol=1e-4), "tiled-channel mismatch"

    print("KERNEL_OK")
</pallas_src>

<mosaic_0001>
module attributes {stable_mosaic.version = 11 : i64} {
  func.func @_tmn_kernel(%arg0: i32, %arg1: i32, %arg2: memref<1x8x256xf32, #tpu.memory_space<vmem>>, %arg3: memref<1x8x2xf32, #tpu.memory_space<vmem>>, %arg4: memref<8x8xf32, #tpu.memory_space<vmem>>, %arg5: memref<1x8x256xf32, #tpu.memory_space<vmem>>) attributes {dimension_semantics = [#tpu.dimension_semantics<parallel>, #tpu.dimension_semantics<parallel>], iteration_bounds = array<i64: 2, 1>, scalar_prefetch = 0 : i64, scratch_operands = 0 : i64, tpu.core_type = #tpu.core_type<tc>, window_params = [{transform_indices = @transform_0, window_bounds = array<i64: 1, 8, 256>}, {transform_indices = @transform_1, window_bounds = array<i64: 1, 8, 2>}, {pipeline_mode = #tpu.pipeline_mode<synchronous>, transform_indices = @transform_2, window_bounds = array<i64: 8, 8>}, {transform_indices = @transform_3, window_bounds = array<i64: 1, 8, 256>}]} {
    %c0 = arith.constant 0 : index
    %c0_0 = arith.constant 0 : index
    %c0_1 = arith.constant 0 : index
    %0 = vector.load %arg2[%c0, %c0_0, %c0_1] : memref<1x8x256xf32, #tpu.memory_space<vmem>>, vector<1x8x256xf32>
    %1 = vector.shape_cast %0 : vector<1x8x256xf32> to vector<8x256xf32>
    %c0_2 = arith.constant 0 : index
    %c0_3 = arith.constant 0 : index
    %c0_4 = arith.constant 0 : index
    %2 = vector.load %arg3[%c0_2, %c0_3, %c0_4] : memref<1x8x2xf32, #tpu.memory_space<vmem>>, vector<1x8x2xf32>
    %3 = vector.shape_cast %2 : vector<1x8x2xf32> to vector<8x2xf32>
    %c0_5 = arith.constant 0 : index
    %c0_6 = arith.constant 0 : index
    %4 = vector.load %arg4[%c0_5, %c0_6] : memref<8x8xf32, #tpu.memory_space<vmem>>, vector<8x8xf32>
    %cst = arith.constant dense<0.000000e+00> : vector<8xf32>
    %5 = vector.multi_reduction <add>, %1, %cst [1] : vector<8x256xf32> to vector<8xf32>
    %6 = vector.shape_cast %5 : vector<8xf32> to vector<8x1xf32>
    %cst_7 = arith.constant dense<0.000000e+00> : vector<8x1xf32>
    %7 = tpu.matmul %4, %6, %cst_7 {dimension_numbers = #tpu.dot_dimension_numbers<[1], [0], [0], [1], [0, 0, 1, 1], [], []>} : vector<8x8xf32>, vector<8x1xf32>, vector<8x1xf32> -> vector<8x1xf32>
    %8 = vector.broadcast %7 : vector<8x1xf32> to vector<8x256xf32>
    %9 = arith.subf %1, %8 : vector<8x256xf32>
    %10 = arith.mulf %9, %9 : vector<8x256xf32>
    %cst_8 = arith.constant dense<0.000000e+00> : vector<8xf32>
    %11 = vector.multi_reduction <add>, %10, %cst_8 [1] : vector<8x256xf32> to vector<8xf32>
    %12 = vector.shape_cast %11 : vector<8xf32> to vector<8x1xf32>
    %cst_9 = arith.constant dense<0.000000e+00> : vector<8x1xf32>
    %13 = tpu.matmul %4, %12, %cst_9 {dimension_numbers = #tpu.dot_dimension_numbers<[1], [0], [0], [1], [0, 0, 1, 1], [], []>} : vector<8x8xf32>, vector<8x1xf32>, vector<8x1xf32> -> vector<8x1xf32>
    %cst_10 = arith.constant 9.99999974E-6 : f32
    %14 = vector.broadcast %cst_10 : f32 to vector<8x1xf32>
    %15 = arith.addf %13, %14 : vector<8x1xf32>
    %16 = math.rsqrt %15 : vector<8x1xf32>
    %17 = vector.extract_strided_slice %3 {offsets = [0, 0], sizes = [8, 1], strides = [1, 1]} : vector<8x2xf32> to vector<8x1xf32>
    %18 = arith.mulf %16, %17 : vector<8x1xf32>
    %19 = vector.extract_strided_slice %3 {offsets = [0, 1], sizes = [8, 1], strides = [1, 1]} : vector<8x2xf32> to vector<8x1xf32>
    %20 = vector.broadcast %18 : vector<8x1xf32> to vector<8x256xf32>
    %21 = arith.mulf %9, %20 : vector<8x256xf32>
    %22 = vector.broadcast %19 : vector<8x1xf32> to vector<8x256xf32>
    %23 = arith.addf %21, %22 : vector<8x256xf32>
    %c0_11 = arith.constant 0 : index
    %c0_12 = arith.constant 0 : index
    %c0_13 = arith.constant 0 : index
    %24 = vector.load %arg5[%c0_11, %c0_12, %c0_13] : memref<1x8x256xf32, #tpu.memory_space<vmem>>, vector<1x8x256xf32>
    %25 = vector.shape_cast %24 : vector<1x8x256xf32> to vector<8x256xf32>
    %26 = vector.shape_cast %23 : vector<8x256xf32> to vector<1x8x256xf32>
    tpu.vector_store %arg5[%c0_11, %c0_12, %c0_13], %26 {strides = array<i32>} : memref<1x8x256xf32, #tpu.memory_space<vmem>>, vector<1x8x256xf32>,
    return
  }
  func.func @transform_0(%arg0: i32, %arg1: i32) -> (i32, i32, i32) {
    %c0_i32 = arith.constant 0 : i32
    %c0_i32_0 = arith.constant 0 : i32
    return %arg0, %arg1, %c0_i32 : i32, i32, i32
  }
  func.func @transform_1(%arg0: i32, %arg1: i32) -> (i32, i32, i32) {
    %c0_i32 = arith.constant 0 : i32
    %c0_i32_0 = arith.constant 0 : i32
    return %arg0, %arg1, %c0_i32 : i32, i32, i32
  }
  func.func @transform_2(%arg0: i32, %arg1: i32) -> (i32, i32) {
    %c0_i32 = arith.constant 0 : i32
    %c0_i32_0 = arith.constant 0 : i32
    %c0_i32_1 = arith.constant 0 : i32
    return %c0_i32, %c0_i32_0 : i32, i32
  }
  func.func @transform_3(%arg0: i32, %arg1: i32) -> (i32, i32, i32) {
    %c0_i32 = arith.constant 0 : i32
    %c0_i32_0 = arith.constant 0 : i32
    return %arg0, %arg1, %c0_i32 : i32, i32, i32
  }
}

</mosaic_0001>

<llo_original>
// kernel: tpu_custom_call.1
$region0: #{tpu_custom_call.1}
  #allocation0 [shape = 'u32[]', space=smem, size = 0x4, offset = 0x4, fixed_abs, tag = 'smem constant byte address 0x4 - core index']
  #allocation1 [shape = 'u32[144,128]{1,0:T(1,128)}', space=vmem, size = 0x12000, scoped, tag = 'internal scratch']
  %s0 = inlined_call_operand.hbm [shape: f32[2,8,256], index: 0, kind: input, shape index: {}]
  %s1 = inlined_call_operand.vmem [shape: f32[2,8,2], index: 1, kind: input, shape index: {}]
  %s2 = inlined_call_operand.vmem [shape: f32[8,8], index: 2, kind: input, shape index: {}]
  %s3 = inlined_call_operand.hbm [shape: f32[2,8,256], index: 3, kind: output, shape index: {}]
  %s4 = sld [smem:[#allocation0]]
  $region49: #{tpu_custom_call.1} parent=0
    _
  %s6 = ssub.s32 1, %s4
  %s7 = scalar_select 0, %s6, %s4
  $region1: #{tpu_custom_call.1} parent=0
    #allocation2 [shape = 'u8[16384]{0}', space=vmem, size = 0x4000, scoped, tag = 'input window, operand 0']
    #allocation3 [shape = 's32[2]{0}', space=sflag, size = 0x8, scoped, tag = 'scoped memory for tpu_custom_call.1']
    #allocation4 [shape = 's32[2]{0}', space=sflag, size = 0x8, scoped, tag = 'scoped memory for tpu_custom_call.1']
    #allocation5 [shape = 'u8[16384]{0}', space=vmem, size = 0x4000, scoped, tag = 'output window, operand 0']
    %8 = vsyncpa [#allocation3], 0
    %s9 = scalar_lea.sflag [#allocation3], 1
    %10 = vsyncpa %s9, 0
    %11 = vsyncpa [#allocation4], 0
    %s12 = scalar_lea.sflag [#allocation4], 1
    %13 = vsyncpa %s12, 0
    loop: start=0, step=1, limit=4
    $region2: #{tpu_custom_call.1} parent=1 // loop_pre_header
      _
    $region3: #{tpu_custom_call.1} parent=1 // loop_header
      %s15 = sphi 0, %s19
      %p16 = scmp.ge.s32.totalorder %s15, 4
      %s22 = sphi 0, %s34
      %s23 = sphi 0, %s30
      %s24 = sphi 0, %s22
      %s25 = sphi 0, %s23
      %s26 = sphi 0, %s24
      %s27 = sphi 0, %s25
      %s39 = sphi 0, %s41
      %s42 = sphi 0, %s39
      %s43 = sphi 0, %s42
      %s59 = sphi 0, %s43
      %s67 = sphi 0, %s69
      %s70 = sphi 0, %s67
      %s71 = sphi 0, %s70
      %s87 = sphi 0, %s71
      %s91 = sphi 0, %s91
      %s93 = sphi 0, %s91
      %s94 = sphi 0, %s93
      %s108 = sphi 0, %s94
      %s116 = sphi 0, %s118
      %s119 = sphi 0, %s116
      %s120 = sphi 0, %s119
      %s136 = sphi 0, %s120
    $region4: #{tpu_custom_call.1} parent=1 // loop_header_branch
      %18 = sbr.rel (%p16) target = $region8
    $region5: #{tpu_custom_call.1} parent=1 // loop_body
      %s20 = ssub.s32 %s15, 1
      %s21 = ssub.s32 %s15, 2
      %s28 = sadd.s32 1, %s23
      %p29 = scmp.ge.s32.totalorder %s28, 1
      %s30 = scalar_select %p29, 0, %s28
      %s31 = sadd.s32 1, %s22
      %s32 = scalar_select %p29, %s31, %s22
      %p33 = scmp.ge.s32.totalorder %s32, 2
      %s34 = scalar_select %p33, 0, %s32
      %s35 = ssub.s32 %s22, %s34
      %s36 = ssub.s32 %s23, %s30
      %s37 = sor.u32 %s35, %s36
      %p38 = scmp.eq.s32.totalorder %s37, 0
      %s40 = sadd.s32 %s39, 1
      %s41 = scalar_select %p38, %s39, %s40
      %p44 = pneg %p38
      %p45 = scmp.eq.s32.totalorder %s15, 1
      %p46 = por %p44, %p45
      %p47 = scmp.ne.s32.totalorder %s39, %s42
      %p48 = scmp.eq.s32.totalorder %s15, 0
      %p49 = por %p47, %p48
      %p50 = scmp.ne.s32.totalorder %s39, %s42
      %p51 = scmp.eq.s32.totalorder %s20, 1
      %p52 = por %p50, %p51
      %p53 = scmp.ne.s32.totalorder %s42, %s43
      %p54 = scmp.eq.s32.totalorder %s20, 0
      %p55 = por %p53, %p54
      %p56 = scmp.ne.s32.totalorder %s42, %s43
      %p57 = scmp.eq.s32.totalorder %s21, 1
      %p58 = por %p56, %p57
      %p60 = scmp.ne.s32.totalorder %s43, %s59
      %p61 = scmp.eq.s32.totalorder %s21, 0
      %p62 = por %p60, %p61
      %s63 = ssub.s32 %s22, %s34
      %s64 = ssub.s32 %s23, %s30
      %s65 = sor.u32 %s63, %s64
      %p66 = scmp.eq.s32.totalorder %s65, 0
      %s68 = sadd.s32 %s67, 1
      %s69 = scalar_select %p66, %s67, %s68
      %p72 = pneg %p66
      %p73 = scmp.eq.s32.totalorder %s15, 1
      %p74 = por %p72, %p73
      %p75 = scmp.ne.s32.totalorder %s67, %s70
      %p76 = scmp.eq.s32.totalorder %s15, 0
      %p77 = por %p75, %p76
      %p78 = scmp.ne.s32.totalorder %s67, %s70
      %p79 = scmp.eq.s32.totalorder %s20, 1
      %p80 = por %p78, %p79
      %p81 = scmp.ne.s32.totalorder %s70, %s71
      %p82 = scmp.eq.s32.totalorder %s20, 0
      %p83 = por %p81, %p82
      %p84 = scmp.ne.s32.totalorder %s70, %s71
      %p85 = scmp.eq.s32.totalorder %s21, 1
      %p86 = por %p84, %p85
      %p88 = scmp.ne.s32.totalorder %s71, %s87
      %p89 = scmp.eq.s32.totalorder %s21, 0
      %p90 = por %p88, %p89
      %s92 = sadd.s32 %s91, 1
      %p95 = scmp.eq.s32.totalorder %s15, 1
      %p96 = scmp.ne.s32.totalorder %s91, %s93
      %p97 = scmp.eq.s32.totalorder %s15, 0
      %p98 = por %p96, %p97
      %p99 = scmp.ne.s32.totalorder %s91, %s93
      %p100 = scmp.eq.s32.totalorder %s20, 1
      %p101 = por %p99, %p100
      %p102 = scmp.ne.s32.totalorder %s93, %s94
      %p103 = scmp.eq.s32.totalorder %s20, 0
      %p104 = por %p102, %p103
      %p105 = scmp.ne.s32.totalorder %s93, %s94
      %p106 = scmp.eq.s32.totalorder %s21, 1
      %p107 = por %p105, %p106
      %p109 = scmp.ne.s32.totalorder %s94, %s108
      %p110 = scmp.eq.s32.totalorder %s21, 0
      %p111 = por %p109, %p110
      %s112 = ssub.s32 %s22, %s34
      %s113 = ssub.s32 %s23, %s30
      %s114 = sor.u32 %s112, %s113
      %p115 = scmp.eq.s32.totalorder %s114, 0
      %s117 = sadd.s32 %s116, 1
      %s118 = scalar_select %p115, %s116, %s117
      %p121 = pneg %p115
      %p122 = scmp.eq.s32.totalorder %s15, 1
      %p123 = por %p121, %p122
      %p124 = scmp.ne.s32.totalorder %s116, %s119
      %p125 = scmp.eq.s32.totalorder %s15, 0
      %p126 = por %p124, %p125
      %p127 = scmp.ne.s32.totalorder %s116, %s119
      %p128 = scmp.eq.s32.totalorder %s20, 1
      %p129 = por %p127, %p128
      %p130 = scmp.ne.s32.totalorder %s119, %s120
      %p131 = scmp.eq.s32.totalorder %s20, 0
      %p132 = por %p130, %p131
      %p133 = scmp.ne.s32.totalorder %s119, %s120
      %p134 = scmp.eq.s32.totalorder %s21, 1
      %p135 = por %p133, %p134
      %p137 = scmp.ne.s32.totalorder %s120, %s136
      %p138 = scmp.eq.s32.totalorder %s21, 0
      %p139 = por %p137, %p138
      %p140 = scmp.le.s32.totalorder 1, %s15
      %p141 = scmp.lt.s32.totalorder %s15, 3
      %p142 = pnand %p140, %p141
      %p143 = pneg %p142
      // Predicated region
      $region9: #{tpu_custom_call.1} parent=5 // pred_check
        _
      $region10: #{tpu_custom_call.1} parent=5 // pred_check_branch
        %145 = sbr.rel (%p142) target = $region12
      $region11: #{tpu_custom_call.1} parent=5 // pred_region
        %s146 = ssub.s32 %s15, 1
        // Predicated region
        $region13: #{tpu_custom_call.1} parent=11 // pred_check
          %p147 = pneg %p104
        $region14: #{tpu_custom_call.1} parent=11 // pred_check_branch
          %149 = sbr.rel (%p147) target = $region16
        $region15: #{tpu_custom_call.1} parent=11 // pred_region
          _
        $region16: #{tpu_custom_call.1} parent=11 // pred_fallthru
          _
      $region12: #{tpu_custom_call.1} parent=5 // pred_fallthru
        _
      %p150 = scmp.lt.s32.totalorder %s15, 2
      // Predicated region
      $region17: #{tpu_custom_call.1} parent=5 // pred_check
        %p151 = pneg %p150
      $region18: #{tpu_custom_call.1} parent=5 // pred_check_branch
        %153 = sbr.rel (%p151) target = $region20
      $region19: #{tpu_custom_call.1} parent=5 // pred_region
        // Predicated region
        $region21: #{tpu_custom_call.1} parent=19 // pred_check
          %p154 = pneg %p49
        $region22: #{tpu_custom_call.1} parent=19 // pred_check_branch
          %156 = sbr.rel (%p154) target = $region24
        $region23: #{tpu_custom_call.1} parent=19 // pred_region
          %s157 = sand.u32 %s39, 1
          %s158 = scalar_lea.sflag [#allocation3], %s157
          %s159 = sand.u32 %s39, 1
          %s160 = smul.addr %s159, 16
          %s161 = scalar_lea.vmem [#allocation2], %s160
          %s163 = ssub.s32 256, 256
          %164 = vsyncadd %s158, %s163
          %s165 = smul.addr %s23, 2
          %s166 = smul.addr %s22, 2
          %s167 = sadd.s32 %s165, %s166
          %s168 = smul.addr %s167, 128
          %s169 = scalar_lea.hbm %s0, %s168
          %s171 = sshll.u32 %s161, 4
          %s172 = int_to_ptr.vmem [resolvable:$true] %s171
          %174 = dma.hbm_to_vmem [thread:$0]  %s169, 256, %s172, %s158
        $region24: #{tpu_custom_call.1} parent=19 // pred_fallthru
          _
        // Predicated region
        $region25: #{tpu_custom_call.1} parent=19 // pred_check
          %p175 = pneg %p77
        $region26: #{tpu_custom_call.1} parent=19 // pred_check_branch
          %177 = sbr.rel (%p175) target = $region28
        $region27: #{tpu_custom_call.1} parent=19 // pred_region
          %p178 = scmp.lt.s32.totalorder %s22, 1
          %s179 = scalar_select %p178, %s22, 1
          %p180 = scmp.lt.s32.totalorder %s23, 0
          %s181 = scalar_select %p180, %s23, 0
          %s182 = sadd.s32 %s181, %s179
          %s183 = smul.addr %s182, 8
          %s184 = scalar_lea.vmem %s1, %s183
        $region28: #{tpu_custom_call.1} parent=19 // pred_fallthru
          _
      $region20: #{tpu_custom_call.1} parent=5 // pred_fallthru
        _
      %p185 = scmp.le.s32.totalorder 1, %s15
      %p186 = scmp.lt.s32.totalorder %s15, 3
      %p187 = pnand %p185, %p186
      %p188 = pneg %p187
      // Predicated region
      $region29: #{tpu_custom_call.1} parent=5 // pred_check
        _
      $region30: #{tpu_custom_call.1} parent=5 // pred_check_branch
        %190 = sbr.rel (%p187) target = $region32
      $region31: #{tpu_custom_call.1} parent=5 // pred_region
        %s191 = ssub.s32 %s15, 1
        %s192 = sand.u32 %s42, 1
        %s193 = scalar_lea.sflag [#allocation3], %s192
        %s194 = sand.u32 %s42, 1
        %s195 = smul.addr %s194, 16
        %s196 = scalar_lea.vmem [#allocation2], %s195
        // Predicated region
        $region33: #{tpu_custom_call.1} parent=31 // pred_check
          %p197 = pneg %p55
        $region34: #{tpu_custom_call.1} parent=31 // pred_check_branch
          %199 = sbr.rel (%p197) target = $region36
        $region35: #{tpu_custom_call.1} parent=31 // pred_region
          %200 = dma.done %s193, 256
        $region36: #{tpu_custom_call.1} parent=31 // pred_fallthru
          _
        %s201 = sand.u32 %s42, 1
        %s202 = scalar_lea.sflag [#allocation3], %s201
        %s203 = sand.u32 %s42, 1
        %s204 = smul.addr %s203, 16
        %s205 = scalar_lea.vmem [#allocation2], %s204
        %p206 = pneg %p55
        %p207 = pneg %p52
        %p208 = scmp.lt.s32.totalorder %s24, 1
        %s209 = scalar_select %p208, %s24, 1
        %p210 = scmp.lt.s32.totalorder %s25, 0
        %s211 = scalar_select %p210, %s25, 0
        %s212 = sadd.s32 %s211, %s209
        %s213 = smul.addr %s212, 8
        %s214 = scalar_lea.vmem %s1, %s213
        %p215 = pneg %p83
        %p216 = pneg %p80
        %p217 = pneg %p104
        %p218 = pneg %p101
        %p219 = pneg %p132
        %p220 = pneg %p129
        %s221 = sand.u32 %s119, 1
        %s222 = scalar_lea.sflag [#allocation4], %s221
        %s223 = sand.u32 %s119, 1
        %s224 = smul.addr %s223, 16
        %s225 = scalar_lea.vmem [#allocation5], %s224
        %p226 = scmp.lt.s32.totalorder %s24, 1
        %s227 = scalar_select %p226, %s24, 1
        %p228 = scmp.lt.s32.totalorder %s25, 0
        %s229 = scalar_select %p228, %s25, 0
        %s230 = sadd.s32 %s229, %s227
        %s231 = smul.addr %s230, 8
        %s232 = scalar_lea.vmem %s1, %s231
        %v233 = vld [vmem:[%s196] sm:$0xff]
        %v234 = vld [vmem:[%s196 + $0x8] sm:$0xff]
        %v235 = vld [vmem:[%s232] sm:$0xff]
        %v236 = vld [vmem:[%s2] sm:$0xff]
        %v237 = vadd.f32 %v233, %v234
        %238 = vadd.xlane.f32.xlu0 %v237
        %v239 = vpop.xlane.xlu0 %238
        %vm240 = vcmask 64512
        %v242 = vsel %vm240, %v236, 0
        %244 = vmatprep.subr.mxu0 0.0
        %245 = vmatpush1.msra.mxu0 0.0
        %246 = vmatprep.subr.mxu0 0.0
        %247 = vmatpush1.msra.mxu0 0.0
        %248 = vmatprep.subr.mxu0 0.0
        %249 = vmatpush1.msra.mxu0 0.0
        %250 = vmatprep.subr.mxu0 0.0
        %251 = vmatpush1.msra.mxu0 0.0
        %252 = vmatprep.subr.mxu0 0.0
        %253 = vmatpush1.msra.mxu0 0.0
        %254 = vmatprep.subr.mxu0 0.0
        %255 = vmatpush1.msra.mxu0 0.0
        %256 = vmatprep.subr.mxu0 0.0
        %257 = vmatpush1.msra.mxu0 0.0
        %258 = vmatprep.subr.mxu0 0.0
        %259 = vmatpush1.msra.mxu0 0.0
        %260 = vmatprep.subr.mxu0 0.0
        %261 = vmatpush1.msra.mxu0 0.0
        %262 = vmatprep.subr.mxu0 0.0
        %263 = vmatpush1.msra.mxu0 0.0
        %264 = vmatprep.subr.mxu0 0.0
        %265 = vmatpush1.msra.mxu0 0.0
        %266 = vmatprep.subr.mxu0 0.0
        %267 = vmatpush1.msra.mxu0 0.0
        %268 = vmatprep.subr.mxu0 0.0
        %269 = vmatpush1.msra.mxu0 0.0
        %270 = vmatprep.subr.mxu0 0.0
        %271 = vmatpush1.msra.mxu0 0.0
        %272 = vmatprep.subr.mxu0 0.0
        %273 = vmatpush1.msra.mxu0 0.0
        %274 = vmatprep.subr.mxu0 0.0
        %275 = vmatpush1.msra.mxu0 %v239
        %276 = vmatprep.subr.mxu0 0.0
        %277 = vmatpush2.msra.mxu0 0.0
        %278 = vmatprep.subr.mxu0 0.0
        %279 = vmatpush2.msra.mxu0 0.0
        %280 = vmatprep.subr.mxu0 0.0
        %281 = vmatpush2.msra.mxu0 0.0
        %282 = vmatprep.subr.mxu0 0.0
        %283 = vmatpush2.msra.mxu0 0.0
        %284 = vmatprep.subr.mxu0 0.0
        %285 = vmatpush2.msra.mxu0 0.0
        %286 = vmatprep.subr.mxu0 0.0
        %287 = vmatpush2.msra.mxu0 0.0
        %288 = vmatprep.subr.mxu0 0.0
        %289 = vmatpush2.msra.mxu0 0.0
        %290 = vmatprep.subr.mxu0 0.0
        %291 = vmatpush2.msra.mxu0 0.0
        %292 = vmatprep.subr.mxu0 0.0
        %293 = vmatpush2.msra.mxu0 0.0
        %294 = vmatprep.subr.mxu0 0.0
        %295 = vmatpush2.msra.mxu0 0.0
        %296 = vmatprep.subr.mxu0 0.0
        %297 = vmatpush2.msra.mxu0 0.0
        %298 = vmatprep.subr.mxu0 0.0
        %299 = vmatpush2.msra.mxu0 0.0
        %300 = vmatprep.subr.mxu0 0.0
        %301 = vmatpush2.msra.mxu0 0.0
        %302 = vmatprep.subr.mxu0 0.0
        %303 = vmatpush2.msra.mxu0 0.0
        %304 = vmatprep.subr.mxu0 0.0
        %305 = vmatpush2.msra.mxu0 0.0
        %306 = vmatprep.subr.mxu0 0.0
        %307 = vmatpush2.msra.mxu0 0.0
        %308 = vmatprep.mubr.f32.mxu0 0.0
        %309 = vmatmul.mubr.f32.gmra.mxu0 %v242
        %v310 = vpop.f32.mrf.mxu0
        %v311 = vadd.f32 0.0, %v310
        %v312 = vpop.f32.mrf.mxu0
        %313 = vdwg.mxu0
        %315 = vset.pattern.permute.xlu0 0
        %316 = vperm.xlu0 %315, %v311
        %v317 = vpop.permute.xlu0 %316
        %v319 = vsub.f32 %v233, %v317
        %v320 = vsub.f32 %v234, %v317
        %v321 = vmul.f32 %v319, %v319
        %v322 = vmul.f32 %v320, %v320
        %v323 = vadd.f32 %v321, %v322
        %324 = vadd.xlane.f32.xlu0 %v323
        %v325 = vpop.xlane.xlu0 %324
        %326 = vmatprep.subr.mxu0 0.0
        %327 = vmatpush1.msra.mxu0 0.0
        %328 = vmatprep.subr.mxu0 0.0
        %329 = vmatpush1.msra.mxu0 0.0
        %330 = vmatprep.subr.mxu0 0.0
        %331 = vmatpush1.msra.mxu0 0.0
        %332 = vmatprep.subr.mxu0 0.0
        %333 = vmatpush1.msra.mxu0 0.0
        %334 = vmatprep.subr.mxu0 0.0
        %335 = vmatpush1.msra.mxu0 0.0
        %336 = vmatprep.subr.mxu0 0.0
        %337 = vmatpush1.msra.mxu0 0.0
        %338 = vmatprep.subr.mxu0 0.0
        %339 = vmatpush1.msra.mxu0 0.0
        %340 = vmatprep.subr.mxu0 0.0
        %341 = vmatpush1.msra.mxu0 0.0
        %342 = vmatprep.subr.mxu0 0.0
        %343 = vmatpush1.msra.mxu0 0.0
        %344 = vmatprep.subr.mxu0 0.0
        %345 = vmatpush1.msra.mxu0 0.0
        %346 = vmatprep.subr.mxu0 0.0
        %347 = vmatpush1.msra.mxu0 0.0
        %348 = vmatprep.subr.mxu0 0.0
        %349 = vmatpush1.msra.mxu0 0.0
        %350 = vmatprep.subr.mxu0 0.0
        %351 = vmatpush1.msra.mxu0 0.0
        %352 = vmatprep.subr.mxu0 0.0
        %353 = vmatpush1.msra.mxu0 0.0
        %354 = vmatprep.subr.mxu0 0.0
        %355 = vmatpush1.msra.mxu0 0.0
        %356 = vmatprep.subr.mxu0 0.0
        %357 = vmatpush1.msra.mxu0 %v325
        %358 = vmatprep.subr.mxu0 0.0
        %359 = vmatpush2.msra.mxu0 0.0
        %360 = vmatprep.subr.mxu0 0.0
        %361 = vmatpush2.msra.mxu0 0.0
        %362 = vmatprep.subr.mxu0 0.0
        %363 = vmatpush2.msra.mxu0 0.0
        %364 = vmatprep.subr.mxu0 0.0
        %365 = vmatpush2.msra.mxu0 0.0
        %366 = vmatprep.subr.mxu0 0.0
        %367 = vmatpush2.msra.mxu0 0.0
        %368 = vmatprep.subr.mxu0 0.0
        %369 = vmatpush2.msra.mxu0 0.0
        %370 = vmatprep.subr.mxu0 0.0
        %371 = vmatpush2.msra.mxu0 0.0
        %372 = vmatprep.subr.mxu0 0.0
        %373 = vmatpush2.msra.mxu0 0.0
        %374 = vmatprep.subr.mxu0 0.0
        %375 = vmatpush2.msra.mxu0 0.0
        %376 = vmatprep.subr.mxu0 0.0
        %377 = vmatpush2.msra.mxu0 0.0
        %378 = vmatprep.subr.mxu0 0.0
        %379 = vmatpush2.msra.mxu0 0.0
        %380 = vmatprep.subr.mxu0 0.0
        %381 = vmatpush2.msra.mxu0 0.0
        %382 = vmatprep.subr.mxu0 0.0
        %383 = vmatpush2.msra.mxu0 0.0
        %384 = vmatprep.subr.mxu0 0.0
        %385 = vmatpush2.msra.mxu0 0.0
        %386 = vmatprep.subr.mxu0 0.0
        %387 = vmatpush2.msra.mxu0 0.0
        %388 = vmatprep.subr.mxu0 0.0
        %389 = vmatpush2.msra.mxu0 0.0
        %390 = vmatprep.mubr.f32.mxu0 0.0
        %391 = vmatmul.mubr.f32.gmra.mxu0 %v242
        %v392 = vpop.f32.mrf.mxu0
        %v393 = vadd.f32 1e-05, %v392
        %v394 = vpop.f32.mrf.mxu0
        %395 = vdwg.mxu0
        %v396 = vrsqrt.pop %v393
        %v397 = vmul.f32 %v396, %v235
        %399 = vset.pattern.permute.xlu0 0
        %400 = vperm.xlu0 %399, %v397
        %v401 = vpop.permute.xlu0 %400
        %v403 = vmul.f32 %v319, %v401
        %v404 = vmul.f32 %v320, %v401
        %406 = vset.pattern.permute.xlu0 1
        %407 = vperm.xlu0 %406, %v235
        %v408 = vpop.permute.xlu0 %407
        %v410 = vadd.f32 %v403, %v408
        %v411 = vadd.f32 %v404, %v408
        %412 = vst [vmem:[%s225] sm:$0xff] %v410
        %413 = vst [vmem:[%s225 + $0x8] sm:$0xff] %v411
        %s414 = sand.u32 %s119, 1
        %s415 = scalar_lea.sflag [#allocation4], %s414
        %s416 = sand.u32 %s119, 1
        %s417 = smul.addr %s416, 16
        %s418 = scalar_lea.vmem [#allocation5], %s417
        // Predicated region
        $region37: #{tpu_custom_call.1} parent=31 // pred_check
          %p419 = pneg %p129
        $region38: #{tpu_custom_call.1} parent=31 // pred_check_branch
          %421 = sbr.rel (%p419) target = $region40
        $region39: #{tpu_custom_call.1} parent=31 // pred_region
          %s423 = ssub.s32 256, 256
          %424 = vsyncadd %s415, %s423
          %s425 = smul.addr %s25, 2
          %s426 = smul.addr %s24, 2
          %s427 = sadd.s32 %s425, %s426
          %s428 = smul.addr %s427, 128
          %s429 = scalar_lea.hbm %s3, %s428
          %s431 = sshll.u32 %s418, 4
          %s432 = int_to_ptr.vmem [resolvable:$true] %s431
          %434 = dma.vmem_to_hbm [thread:$0]  %s432, 256, %s429, %s415
        $region40: #{tpu_custom_call.1} parent=31 // pred_fallthru
          _
      $region32: #{tpu_custom_call.1} parent=5 // pred_fallthru
        _
      %p435 = scmp.le.s32.totalorder 2, %s15
      // Predicated region
      $region41: #{tpu_custom_call.1} parent=5 // pred_check
        %p436 = pneg %p435
      $region42: #{tpu_custom_call.1} parent=5 // pred_check_branch
        %438 = sbr.rel (%p436) target = $region44
      $region43: #{tpu_custom_call.1} parent=5 // pred_region
        %s439 = ssub.s32 %s15, 2
        // Predicated region
        $region45: #{tpu_custom_call.1} parent=43 // pred_check
          %p440 = pneg %p135
        $region46: #{tpu_custom_call.1} parent=43 // pred_check_branch
          %442 = sbr.rel (%p440) target = $region48
        $region47: #{tpu_custom_call.1} parent=43 // pred_region
          %s443 = sand.u32 %s120, 1
          %s444 = scalar_lea.sflag [#allocation4], %s443
          %s445 = sand.u32 %s120, 1
          %s446 = smul.addr %s445, 16
          %s447 = scalar_lea.vmem [#allocation5], %s446
          %448 = dma.done %s444, 256
        $region48: #{tpu_custom_call.1} parent=43 // pred_fallthru
          _
      $region44: #{tpu_custom_call.1} parent=5 // pred_fallthru
        _
    $region6: #{tpu_custom_call.1} parent=1 // loop_footer
      %s19 = sadd.s32 1, %s15
    $region7: #{tpu_custom_call.1} parent=1 // loop_footer_branch
      %14 = sbr.rel target = $region3
    $region8: #{tpu_custom_call.1} parent=1 // loop_exit
      _
    %449 = vsyncpa [#allocation3], 1
    %s450 = scalar_lea.sflag [#allocation3], 1
    %451 = vsyncpa %s450, 1
    %452 = vsyncpa [#allocation4], 1
    %s453 = scalar_lea.sflag [#allocation4], 1
    %454 = vsyncpa %s453, 1

</llo_original>
